<compile_context>
chip_gen: v5e
topology: v5e:2x2
jax: 0.10.0
libtpu: 0.0.40
codegen_flags: <defaults>
</compile_context>

<pallas_src>
import functools
import math

import jax
import jax.numpy as jnp
import numpy as np
from jax.experimental import pallas as pl
from jax.experimental.pallas import tpu as pltpu


# ----------------------------------------------------------------------------
# Kernel 1: Chebyshev diagonals  d[k, :] = diag(T_k(A)),  output shape (orders, N)
# ----------------------------------------------------------------------------
def cheb_diag_kernel(a_ref, at_ref, d_ref, *, orders):
    a = a_ref[...].astype(jnp.float32)                          # (N, N)
    n = a.shape[0]

    rows = [jnp.ones((1, n), jnp.float32)]                      # diag(T_0) = 1

    if orders >= 2:
        r = jax.lax.broadcasted_iota(jnp.int32, (n, n), 0)
        c = jax.lax.broadcasted_iota(jnp.int32, (n, n), 1)
        is_diag = r == c
        # diag(T_1) = diag(A) via masked column-sum (no materialized eye)
        rows.append(jnp.sum(jnp.where(is_diag, a, 0.0), axis=0, keepdims=True))

    if orders >= 3:
        a_t = at_ref[...].astype(jnp.float32)                   # A^T (precomputed)
        t_km2 = None                                            # T_0 (lazy eye)
        t_km1 = a                                               # T_1
        # Full recurrence matrices are only needed up to T_{orders-2}.
        for _ in range(2, orders - 1):
            prev = jnp.where(is_diag, 1.0, 0.0) if t_km2 is None else t_km2
            t_k = 2.0 * jnp.dot(a, t_km1,
                                preferred_element_type=jnp.float32) - prev
            rows.append(jnp.sum(jnp.where(is_diag, t_k, 0.0), axis=0,
                                keepdims=True))
            t_km2, t_km1 = t_km1, t_k
        # Final order: only the diagonal is needed.
        #   diag(2*A@T_{k-1} - T_{k-2}) = 2*colsum(A^T * T_{k-1}) - diag(T_{k-2})
        rows.append(2.0 * jnp.sum(a_t * t_km1, axis=0, keepdims=True)
                    - rows[orders - 3])

    d_ref[...] = jnp.concatenate(rows, axis=0)                  # one lane-dense store


# ----------------------------------------------------------------------------
# Kernel 2: row-tiled fused (one wide matmul) -> per-order scale/sum -> bias -> act
#   x_ref:     (Rblk, T)
#   d_ref:     (Rblk, orders)        (Chebyshev diag per row, broadcast over batch)
#   theta_ref: (T, orders*H)         (lane-concatenated Theta_k slabs)
#   bias_ref:  (1, H)
#   o_ref:     (Rblk, H)
# ----------------------------------------------------------------------------
def cgcn_rows_kernel(x_ref, d_ref, theta_ref, bias_ref, o_ref, *,
                     orders, out_channels, activation):
    # Single MXU matmul per row tile; keep operands in their input dtype.
    y = jnp.dot(x_ref[...], theta_ref[...],
                preferred_element_type=jnp.float32)             # (Rblk, orders*H)
    d = d_ref[...].astype(jnp.float32)                          # (Rblk, orders)

    h = out_channels
    acc = d[:, 0:1] * y[:, 0:h]                                 # VPU scale/accumulate
    for k in range(1, orders):                                  # orders is small/static
        acc = acc + d[:, k:k + 1] * y[:, k * h:(k + 1) * h]
    acc = acc + bias_ref[...].astype(jnp.float32)

    if activation == 'relu':
        acc = jnp.maximum(acc, 0.0)
    elif activation == 'selu':
        acc = jax.nn.selu(acc)
    o_ref[...] = acc.astype(o_ref.dtype)


# ----------------------------------------------------------------------------
# Wrapper
# ----------------------------------------------------------------------------
def _pick_row_block(num_rows):
    """Prefer large row tiles, but keep >=2 grid steps when possible (v7x 2xTC)."""
    if num_rows >= 1024:
        return 512
    if num_rows >= 512:
        return 256
    half = num_rows // 2
    if half >= 8 and half % 8 == 0:
        return half
    return num_rows


def c_gcn_forward(X, A_hat, Theta1, bias, *, orders, activation='relu'):
    B, N, T = X.shape
    H = Theta1.shape[1]
    assert Theta1.shape[0] == T * orders
    assert A_hat.shape == (N, N)

    # ---- Kernel 1: Chebyshev diagonals (shared across the batch) ----
    # Single-block design; live footprint ~ a few N^2 f32 copies.
    # TODO(synk): tile the recurrence over row blocks for very large N
    # (v7x has only 64 MiB physical VMEM).
    cheb_vmem = 6 * 4 * N * N + 4 * N * orders
    d = pl.pallas_call(
        functools.partial(cheb_diag_kernel, orders=orders),
        out_shape=jax.ShapeDtypeStruct((orders, N), jnp.float32),
        grid=(1,),
        in_specs=[pl.BlockSpec((N, N), lambda i: (0, 0)),
                  pl.BlockSpec((N, N), lambda i: (0, 0))],
        out_specs=pl.BlockSpec((orders, N), lambda i: (0, 0)),
        compiler_params=pltpu.CompilerParams(
            vmem_limit_bytes=int(min(96 * 2 ** 20, max(32 * 2 ** 20, 3 * cheb_vmem)))),
    )(A_hat, A_hat.T)

    # ---- Layout prep (cheap XLA-side reshapes) ----
    # Theta1 is (T*orders, H) with order-k slab Theta1[k*T:(k+1)*T].  Lane-concat
    # the slabs so the kernel does ONE matmul: Theta_wide[:, k*H:(k+1)*H] = Theta_k.
    theta_wide = Theta1.reshape(orders, T, H).transpose(1, 0, 2).reshape(T, orders * H)
    x_flat = X.reshape(B * N, T)
    d_nodes = d.T                                                # (N, orders)
    d_flat = jnp.broadcast_to(d_nodes[None], (B, N, orders)).reshape(B * N, orders)
    bias2d = bias.reshape(1, H)

    rows = B * N
    rblk = _pick_row_block(rows)
    num_tiles = -(-rows // rblk)
    rows_pad = num_tiles * rblk
    if rows_pad != rows:
        x_flat = jnp.pad(x_flat, ((0, rows_pad - rows), (0, 0)))
        d_flat = jnp.pad(d_flat, ((0, rows_pad - rows), (0, 0)))

    out_flat = pl.pallas_call(
        functools.partial(cgcn_rows_kernel, orders=orders, out_channels=H,
                          activation=activation),
        out_shape=jax.ShapeDtypeStruct((rows_pad, H), X.dtype),
        grid=(num_tiles,),
        in_specs=[
            pl.BlockSpec((rblk, T), lambda i: (i, 0)),
            pl.BlockSpec((rblk, orders), lambda i: (i, 0)),
            pl.BlockSpec((T, orders * H), lambda i: (0, 0)),
            pl.BlockSpec((1, H), lambda i: (0, 0)),
        ],
        out_specs=pl.BlockSpec((rblk, H), lambda i: (i, 0)),
        compiler_params=pltpu.CompilerParams(dimension_semantics=("parallel",)),
    )(x_flat, d_flat, theta_wide, bias2d)

    return out_flat[:rows].reshape(B, N, H)


# ----------------------------------------------------------------------------
# Pure-JAX reference (mirrors the PyTorch forward exactly)
# ----------------------------------------------------------------------------
def c_gcn_reference(X, A_hat, Theta1, bias, *, orders, activation='relu'):
    N = A_hat.shape[0]
    cheb = [jnp.eye(N, dtype=jnp.float32)]
    if orders > 1:
        cheb.append(A_hat)
    for k in range(2, orders):
        cheb.append(2.0 * A_hat @ cheb[k - 1] - cheb[k - 2])
    feats = [jnp.diagonal(cheb[k])[None, :, None] * X for k in range(orders)]
    fc = jnp.concatenate(feats, axis=2)
    t2 = jnp.einsum('bkj,jh->bkh', fc, Theta1) + bias
    if activation == 'relu':
        t2 = jax.nn.relu(t2)
    if activation == 'selu':
        t2 = jax.nn.selu(t2)
    return t2


if __name__ == "__main__":
    # Small shapes consistent with the module's forward.
    B, N, T = 2, 16, 8          # batch, num_nodes, num_timesteps (in_channels)
    orders = 3
    H = 32                      # out_channels

    key = jax.random.PRNGKey(0)
    kx, ka, kt, kb = jax.random.split(key, 4)

    X = jax.random.normal(kx, (B, N, T), dtype=jnp.float32)
    A = jax.random.normal(ka, (N, N), dtype=jnp.float32) / math.sqrt(N)
    A_hat = 0.5 * (A + A.T)     # symmetric "Laplacian-like" matrix

    # Deterministic parameter init matching reset_parameters():
    stdv = 1.0 / math.sqrt(H)
    Theta1 = jax.random.uniform(kt, (T * orders, H), minval=-stdv, maxval=stdv,
                                dtype=jnp.float32)
    stdv1 = 1.0 / math.sqrt(H)
    bias = jax.random.uniform(kb, (H,), minval=-stdv1, maxval=stdv1,
                              dtype=jnp.float32)

    out = c_gcn_forward(X, A_hat, Theta1, bias, orders=orders, activation='relu')
    out = jax.block_until_ready(out)

    ref = c_gcn_reference(X, A_hat, Theta1, bias, orders=orders, activation='relu')
    np.testing.assert_allclose(np.asarray(out), np.asarray(ref), rtol=1e-2, atol=1e-2)

    print("KERNEL_OK")
</pallas_src>

<mosaic_0001>
module attributes {stable_mosaic.version = 11 : i64} {
  func.func @cheb_diag_kernel(%arg0: i32, %arg1: memref<16x16xf32, #tpu.memory_space<vmem>>, %arg2: memref<16x16xf32, #tpu.memory_space<vmem>>, %arg3: memref<3x16xf32, #tpu.memory_space<vmem>>) attributes {dimension_semantics = [#tpu.dimension_semantics<arbitrary>], iteration_bounds = array<i64: 1>, scalar_prefetch = 0 : i64, scratch_operands = 0 : i64, tpu.core_type = #tpu.core_type<tc>, window_params = [{pipeline_mode = #tpu.pipeline_mode<synchronous>, transform_indices = @transform_0, window_bounds = array<i64: 16, 16>}, {pipeline_mode = #tpu.pipeline_mode<synchronous>, transform_indices = @transform_1, window_bounds = array<i64: 16, 16>}, {pipeline_mode = #tpu.pipeline_mode<synchronous>, transform_indices = @transform_2, window_bounds = array<i64: 3, 16>}]} {
    %c0 = arith.constant 0 : index
    %c0_0 = arith.constant 0 : index
    %0 = vector.load %arg1[%c0, %c0_0] : memref<16x16xf32, #tpu.memory_space<vmem>>, vector<16x16xf32>
    %cst = arith.constant 1.000000e+00 : f32
    %1 = vector.broadcast %cst : f32 to vector<1x16xf32>
    %2 = tpu.iota {dimensions = array<i32: 0>} : vector<16x16xi32>
    %3 = tpu.iota {dimensions = array<i32: 1>} : vector<16x16xi32>
    %4 = arith.cmpi eq, %2, %3 : vector<16x16xi32>
    %cst_1 = arith.constant 0.000000e+00 : f32
    %5 = vector.broadcast %cst_1 : f32 to vector<16x16xf32>
    %6 = arith.select %4, %0, %5 : vector<16x16xi1>, vector<16x16xf32>
    %cst_2 = arith.constant dense<0.000000e+00> : vector<16xf32>
    %7 = vector.multi_reduction <add>, %6, %cst_2 [0] : vector<16x16xf32> to vector<16xf32>
    %8 = vector.shape_cast %7 : vector<16xf32> to vector<1x16xf32>
    %c0_3 = arith.constant 0 : index
    %c0_4 = arith.constant 0 : index
    %9 = vector.load %arg2[%c0_3, %c0_4] : memref<16x16xf32, #tpu.memory_space<vmem>>, vector<16x16xf32>
    %10 = arith.mulf %9, %0 : vector<16x16xf32>
    %cst_5 = arith.constant dense<0.000000e+00> : vector<16xf32>
    %11 = vector.multi_reduction <add>, %10, %cst_5 [0] : vector<16x16xf32> to vector<16xf32>
    %12 = vector.shape_cast %11 : vector<16xf32> to vector<1x16xf32>
    %cst_6 = arith.constant 2.000000e+00 : f32
    %13 = vector.broadcast %cst_6 : f32 to vector<1x16xf32>
    %14 = arith.mulf %13, %12 : vector<1x16xf32>
    %15 = arith.subf %14, %1 : vector<1x16xf32>
    %16 = tpu.concatenate %1, %8, %15 in 0 : vector<1x16xf32>, vector<1x16xf32>, vector<1x16xf32> -> vector<3x16xf32>
    %c0_7 = arith.constant 0 : index
    %c0_8 = arith.constant 0 : index
    %17 = vector.load %arg3[%c0_7, %c0_8] : memref<3x16xf32, #tpu.memory_space<vmem>>, vector<3x16xf32>
    tpu.vector_store %arg3[%c0_7, %c0_8], %16 {strides = array<i32>} : memref<3x16xf32, #tpu.memory_space<vmem>>, vector<3x16xf32>,
    return
  }
  func.func @transform_0(%arg0: i32) -> (i32, i32) {
    %c0_i32 = arith.constant 0 : i32
    %c0_i32_0 = arith.constant 0 : i32
    %c0_i32_1 = arith.constant 0 : i32
    return %c0_i32, %c0_i32_0 : i32, i32
  }
  func.func @transform_1(%arg0: i32) -> (i32, i32) {
    %c0_i32 = arith.constant 0 : i32
    %c0_i32_0 = arith.constant 0 : i32
    %c0_i32_1 = arith.constant 0 : i32
    return %c0_i32, %c0_i32_0 : i32, i32
  }
  func.func @transform_2(%arg0: i32) -> (i32, i32) {
    %c0_i32 = arith.constant 0 : i32
    %c0_i32_0 = arith.constant 0 : i32
    %c0_i32_1 = arith.constant 0 : i32
    return %c0_i32, %c0_i32_0 : i32, i32
  }
}

</mosaic_0001>

<llo_original>
// kernel: tpu_custom_call.1
$region0: #{tpu_custom_call.1}
  #allocation0 [shape = 'u32[]', space=smem, size = 0x4, offset = 0x4, fixed_abs, tag = 'smem constant byte address 0x4 - core index']
  #allocation1 [shape = 'u32[72,128]{1,0:T(1,128)}', space=vmem, size = 0x9000, scoped, tag = 'internal scratch']
  %s0 = inlined_call_operand.hbm [shape: f32[16,16], index: 0, kind: input, shape index: {}]
  %s1 = inlined_call_operand.hbm [shape: f32[16,16], index: 1, kind: input, shape index: {}]
  %s2 = inlined_call_operand.hbm [shape: f32[3,16], index: 2, kind: output, shape index: {}]
  %s3 = sld [smem:[#allocation0]]
  $region26: #{tpu_custom_call.1} parent=0
    _
  %s5 = ssub.s32 1, %s3
  %s6 = scalar_select 0, %s5, %s3
  $region1: #{tpu_custom_call.1} parent=0
    #allocation2 [shape = 'u8[8192]{0}', space=vmem, size = 0x2000, scoped, tag = 'input window, operand 0, single buffered']
    #allocation3 [shape = 's32[1]{0}', space=sflag, size = 0x4, scoped, tag = 'scoped memory for tpu_custom_call.1']
    #allocation4 [shape = 's32[1]{0}', space=sflag, size = 0x4, scoped, tag = 'scoped memory for tpu_custom_call.1']
    #allocation5 [shape = 'u8[8192]{0}', space=vmem, size = 0x2000, scoped, tag = 'input window, operand 1, single buffered']
    #allocation6 [shape = 's32[1]{0}', space=sflag, size = 0x4, scoped, tag = 'scoped memory for tpu_custom_call.1']
    #allocation7 [shape = 'u8[2048]{0}', space=vmem, size = 0x800, scoped, tag = 'output window, operand 0, single buffered']
    %7 = vsyncpa [#allocation3], 0
    %8 = vsyncpa [#allocation6], 0
    %9 = vsyncpa [#allocation4], 0
    // Predicated region
    $region2: #{tpu_custom_call.1} parent=1 // pred_check
      _
    $region3: #{tpu_custom_call.1} parent=1 // pred_check_branch
      %11 = sbr.rel (0) target = $region5
    $region4: #{tpu_custom_call.1} parent=1 // pred_region
      %13 = vsyncadd [#allocation3], 0
      %s14 = sshll.u32 %s0, 4
      %s15 = int_to_ptr.hbm [resolvable:$true] %s14
      %s16 = sshll.u32 [#allocation2], 4
      %s17 = int_to_ptr.vmem [resolvable:$true] %s16
      %22 = dma.hbm_to_vmem [thread:$0]  %s15, 256, %s17, [#allocation3], 128, 128, 8
    $region5: #{tpu_custom_call.1} parent=1 // pred_fallthru
      _
    // Predicated region
    $region6: #{tpu_custom_call.1} parent=1 // pred_check
      _
    $region7: #{tpu_custom_call.1} parent=1 // pred_check_branch
      %24 = sbr.rel (0) target = $region9
    $region8: #{tpu_custom_call.1} parent=1 // pred_region
      %26 = vsyncadd [#allocation6], 0
      %s27 = sshll.u32 %s1, 4
      %s28 = int_to_ptr.hbm [resolvable:$true] %s27
      %s29 = sshll.u32 [#allocation5], 4
      %s30 = int_to_ptr.vmem [resolvable:$true] %s29
      %35 = dma.hbm_to_vmem [thread:$0]  %s28, 256, %s30, [#allocation6], 128, 128, 8
    $region9: #{tpu_custom_call.1} parent=1 // pred_fallthru
      _
    // Predicated region
    $region10: #{tpu_custom_call.1} parent=1 // pred_check
      _
    $region11: #{tpu_custom_call.1} parent=1 // pred_check_branch
      %37 = sbr.rel (0) target = $region13
    $region12: #{tpu_custom_call.1} parent=1 // pred_region
      %39 = dma.done [#allocation3], 256
    $region13: #{tpu_custom_call.1} parent=1 // pred_fallthru
      _
    // Predicated region
    $region14: #{tpu_custom_call.1} parent=1 // pred_check
      _
    $region15: #{tpu_custom_call.1} parent=1 // pred_check_branch
      %41 = sbr.rel (0) target = $region17
    $region16: #{tpu_custom_call.1} parent=1 // pred_region
      %43 = dma.done [#allocation6], 256
    $region17: #{tpu_custom_call.1} parent=1 // pred_fallthru
      _
    %v44 = vld [vmem:[#allocation2] sm:$0xff]
    %v45 = vld [vmem:[#allocation2 + $0x8] sm:$0xff]
    %v46 = vlaneseq
    %v47 = vshrl.u32 %v46, 7
    %v48 = vadd.s32 %v47, 8
    %v49 = vlaneseq
    %v50 = vand.u32 %v49, 127
    %vm51 = vcmp.eq.s32.totalorder %v47, %v50
    %vm52 = vcmp.eq.s32.totalorder %v48, %v50
    %v53 = vsel %vm51, %v44, 0.0
    %v54 = vsel %vm52, %v45, 0.0
    %vm55 = vcmask 130048
    %v56 = vsel %vm55, %v53, 0.0
    %v57 = vsel %vm55, %v54, 0.0
    %v58 = vadd.f32 %v56, %v57
    %v59 = vrot.slane %v58, 4
    %v60 = vadd.f32 %v58, %v59
    %v61 = vrot.slane %v60, 2
    %v62 = vadd.f32 %v60, %v61
    %v63 = vrot.slane %v62, 1
    %v64 = vadd.f32 %v62, %v63
    %v65 = vld [vmem:[#allocation5] sm:$0xff]
    %v66 = vld [vmem:[#allocation5 + $0x8] sm:$0xff]
    %v67 = vmul.f32 %v65, %v44
    %v68 = vmul.f32 %v66, %v45
    %v69 = vsel %vm55, %v67, 0.0
    %v70 = vsel %vm55, %v68, 0.0
    %v71 = vadd.f32 %v69, %v70
    %v72 = vrot.slane %v71, 4
    %v73 = vadd.f32 %v71, %v72
    %v74 = vrot.slane %v73, 2
    %v75 = vadd.f32 %v73, %v74
    %v76 = vrot.slane %v75, 1
    %v77 = vadd.f32 %v75, %v76
    %v78 = vmul.f32 %v77, 2.0
    %v79 = vsub.f32 %v78, 1.0
    %vm80 = vcmask 1040384
    %v81 = vsel %vm80, 1.0, %v64
    %vm82 = vcmask 1041408
    %v83 = vsel %vm82, %v81, %v79
    %vm84 = vcmask 124928
    %85 = vst.msk [vmem:[#allocation7] sm:$0x7] %vm84, %v83
    // Predicated region
    $region18: #{tpu_custom_call.1} parent=1 // pred_check
      _
    $region19: #{tpu_custom_call.1} parent=1 // pred_check_branch
      %87 = sbr.rel (0) target = $region21
    $region20: #{tpu_custom_call.1} parent=1 // pred_region
      %89 = vsyncadd [#allocation4], 0
      %s91 = sshll.u32 [#allocation7], 4
      %s92 = int_to_ptr.vmem [resolvable:$true] %s91
      %s93 = sshll.u32 %s2, 4
      %s94 = int_to_ptr.hbm [resolvable:$true] %s93
      %96 = dma.vmem_to_hbm [thread:$0]  %s92, 64, %s94, [#allocation4]
    $region21: #{tpu_custom_call.1} parent=1 // pred_fallthru
      _
    // Predicated region
    $region22: #{tpu_custom_call.1} parent=1 // pred_check
      _
    $region23: #{tpu_custom_call.1} parent=1 // pred_check_branch
      %98 = sbr.rel (0) target = $region25
    $region24: #{tpu_custom_call.1} parent=1 // pred_region
      %100 = dma.done [#allocation4], 64
    $region25: #{tpu_custom_call.1} parent=1 // pred_fallthru
      _
    %101 = vsyncpa [#allocation3], 1
    %102 = vsyncpa [#allocation6], 1
    %103 = vsyncpa [#allocation4], 1

</llo_original>
